<compile_context>
chip_gen: v7x
topology: tpu7x:2x2x1
jax: 0.10.0
libtpu: 0.0.40
codegen_flags: <defaults>
</compile_context>

<pallas_src>
import jax
import jax.numpy as jnp
from jax.experimental import pallas as pl
from jax.experimental.pallas import tpu as pltpu


def _transpose_tile_kernel(x_ref, o_ref):
    # x_ref: (tS, tH) block in VMEM ; o_ref: (tH, tS) block in VMEM.
    # The batch dim is squeezed away by the BlockSpecs, so this is a pure
    # 2-D transpose (cross-lane unit), no VALU work.
    o_ref[...] = x_ref[...].T


def _pick_tiles(S, H, itemsize, budget_bytes):
    """Pick (tS, tH) for the tiled path, or None -> full-slab fallback.

    Constraints (from the (8,128) layout rule):
      input block  (tS, tH): tS % sublane == 0, tH % 128 == 0 or tH == H
      output block (tH, tS): tH % sublane == 0 or tH == H, tS % 128 == 0
    VMEM: double-buffered in + out ~= 4 * tS * tH * itemsize <= budget.
    """
    sublane = max(8, 32 // itemsize)  # f32: 8, bf16: 16, int8/fp8: 32

    # tS must be a 128-multiple (lane-dense output) and a sublane multiple
    # (128 already is, for every supported dtype), and must divide S evenly.
    s_cands = [c for c in (1024, 512, 384, 256, 128) if S % c == 0]
    if not s_cands:
        return None

    # tH = H (full extent) is always layout-legal; otherwise a 128-multiple
    # that also satisfies the sublane constraint on the output block.
    h_cands = {H}
    for c in (1024, 512, 256, 128):
        if c < H and H % c == 0 and c % sublane == 0:
            h_cands.add(c)
    h_cands = sorted(h_cands, reverse=True)

    for ts in s_cands:                      # prefer the widest output tile
        for th in h_cands:                  # then the biggest H chunk that fits
            if 4 * ts * th * itemsize <= budget_bytes:
                return ts, th
    return None


def permute_021(x, *, vmem_budget_bytes=24 * 1024 * 1024):
    """Pallas equivalent of torch `x.permute(0, 2, 1)` for a 3-D array."""
    B, S, H = x.shape
    itemsize = jnp.dtype(x.dtype).itemsize

    # Advisory cost: this kernel is pure HBM traffic.
    cost = pl.CostEstimate(
        flops=0, transcendentals=0, bytes_accessed=2 * B * S * H * itemsize
    )

    tiles = _pick_tiles(S, H, itemsize, vmem_budget_bytes)

    if tiles is not None:
        tile_s, tile_h = tiles
        grid = (B, S // tile_s, H // tile_h)
        in_specs = [
            pl.BlockSpec((None, tile_s, tile_h), lambda b, s, h: (b, s, h))
        ]
        out_specs = pl.BlockSpec((None, tile_h, tile_s), lambda b, s, h: (b, h, s))
        dim_sem = ("parallel", "parallel", "parallel")
        vmem_limit = 32 * 1024 * 1024  # budget + headroom; raises v5e default
    else:
        # Fallback: one full (S, H) slab per batch element.  Full-extent
        # last-two dims satisfy the (8, 128) rule via the full-dims exception.
        grid = (B,)
        in_specs = [pl.BlockSpec((None, S, H), lambda b: (b, 0, 0))]
        out_specs = pl.BlockSpec((None, H, S), lambda b: (b, 0, 0))
        dim_sem = ("parallel",)
        # Raise the scoped limit only if the double-buffered slabs need it.
        needed = 4 * S * H * itemsize
        vmem_limit = (
            None
            if needed <= 16 * 1024 * 1024
            else min(int(needed * 1.25) + (1 << 20), 60 * 1024 * 1024)
        )

    return pl.pallas_call(
        _transpose_tile_kernel,
        out_shape=jax.ShapeDtypeStruct((B, H, S), x.dtype),
        grid_spec=pltpu.PrefetchScalarGridSpec(
            num_scalar_prefetch=0,
            grid=grid,
            in_specs=in_specs,
            out_specs=out_specs,
        ),
        compiler_params=pltpu.CompilerParams(
            dimension_semantics=dim_sem,
            vmem_limit_bytes=vmem_limit,
        ),
        cost_estimate=cost,
    )(x)


if __name__ == "__main__":
    key = jax.random.PRNGKey(0)

    # 1) Small shape matching the module's (batch, seq, hidden) input.
    #    (Too small / unaligned for tiling -> exercises the full-slab path.)
    B, S, H = 2, 8, 32
    x = jax.random.normal(key, (B, S, H), dtype=jnp.float32)
    out = jax.block_until_ready(permute_021(x))
    ref = jnp.transpose(x, (0, 2, 1))
    assert out.shape == (B, H, S), out.shape
    assert out.dtype == x.dtype, out.dtype
    assert jnp.array_equal(out, ref), "mismatch vs reference transpose (small)"

    # 2) 128-aligned shape -> exercises the tiled, lane-dense-output path
    #    (tS multiple of 128, both S and H tiled/full as budget allows).
    B2, S2, H2 = 2, 1024, 256
    x2 = jax.random.normal(jax.random.PRNGKey(1), (B2, S2, H2), dtype=jnp.float32)
    out2 = jax.block_until_ready(permute_021(x2))
    ref2 = jnp.transpose(x2, (0, 2, 1))
    assert out2.shape == (B2, H2, S2), out2.shape
    assert jnp.array_equal(out2, ref2), "mismatch vs reference transpose (tiled)"

    print("KERNEL_OK")
</pallas_src>

<mosaic_0001>
module attributes {stable_mosaic.version = 11 : i64} {
  func.func @_transpose_tile_kernel(%arg0: i32, %arg1: memref<1x8x32xf32, #tpu.memory_space<vmem>>, %arg2: memref<1x32x8xf32, #tpu.memory_space<vmem>>) attributes {dimension_semantics = [#tpu.dimension_semantics<parallel>], iteration_bounds = array<i64: 2>, scalar_prefetch = 0 : i64, scratch_operands = 0 : i64, tpu.core_type = #tpu.core_type<tc>, window_params = [{transform_indices = @transform_0, window_bounds = array<i64: 1, 8, 32>}, {transform_indices = @transform_1, window_bounds = array<i64: 1, 32, 8>}]} {
    %c0 = arith.constant 0 : index
    %c0_0 = arith.constant 0 : index
    %c0_1 = arith.constant 0 : index
    %0 = vector.load %arg1[%c0, %c0_0, %c0_1] : memref<1x8x32xf32, #tpu.memory_space<vmem>>, vector<1x8x32xf32>
    %1 = vector.shape_cast %0 : vector<1x8x32xf32> to vector<8x32xf32>
    %2 = tpu.transpose %1, [1, 0] : vector<8x32xf32> -> vector<32x8xf32>
    %c0_2 = arith.constant 0 : index
    %c0_3 = arith.constant 0 : index
    %c0_4 = arith.constant 0 : index
    %3 = vector.load %arg2[%c0_2, %c0_3, %c0_4] : memref<1x32x8xf32, #tpu.memory_space<vmem>>, vector<1x32x8xf32>
    %4 = vector.shape_cast %3 : vector<1x32x8xf32> to vector<32x8xf32>
    %5 = vector.shape_cast %2 : vector<32x8xf32> to vector<1x32x8xf32>
    tpu.vector_store %arg2[%c0_2, %c0_3, %c0_4], %5 {strides = array<i32>} : memref<1x32x8xf32, #tpu.memory_space<vmem>>, vector<1x32x8xf32>,
    return
  }
  func.func @transform_0(%arg0: i32) -> (i32, i32, i32) {
    %c0_i32 = arith.constant 0 : i32
    %c0_i32_0 = arith.constant 0 : i32
    %c0_i32_1 = arith.constant 0 : i32
    return %arg0, %c0_i32, %c0_i32_0 : i32, i32, i32
  }
  func.func @transform_1(%arg0: i32) -> (i32, i32, i32) {
    %c0_i32 = arith.constant 0 : i32
    %c0_i32_0 = arith.constant 0 : i32
    %c0_i32_1 = arith.constant 0 : i32
    return %arg0, %c0_i32, %c0_i32_0 : i32, i32, i32
  }
}

</mosaic_0001>

<llo_original>
// kernel: tpu_custom_call.1
$region0: #{tpu_custom_call.1}
  #allocation0 [shape = 'u32[]', space=smem, size = 0x4, offset = 0x4, fixed_abs, tag = 'smem constant byte address 0x4 - core index']
  #allocation1 [shape = 'u32[144,128]{1,0:T(1,128)}', space=vmem, size = 0x12000, scoped, tag = 'internal scratch']
  %s0 = inlined_call_operand.hbm [shape: f32[2,8,32], index: 0, kind: input, shape index: {}]
  %s1 = inlined_call_operand.vmem [shape: f32[2,32,8], index: 1, kind: output, shape index: {}]
  %s2 = sld [smem:[#allocation0]]
  $region41: #{tpu_custom_call.1} parent=0
    _
  %s4 = ssub.s32 1, %s2
  %s5 = scalar_select 0, %s4, %s2
  $region1: #{tpu_custom_call.1} parent=0
    #allocation2 [shape = 'u8[8192]{0}', space=vmem, size = 0x2000, scoped, tag = 'input window, operand 0']
    #allocation3 [shape = 's32[2]{0}', space=sflag, size = 0x8, scoped, tag = 'scoped memory for tpu_custom_call.1']
    %6 = vsyncpa [#allocation3], 0
    %s7 = scalar_lea.sflag [#allocation3], 1
    %8 = vsyncpa %s7, 0
    loop: start=0, step=1, limit=4
    $region2: #{tpu_custom_call.1} parent=1 // loop_pre_header
      _
    $region3: #{tpu_custom_call.1} parent=1 // loop_header
      %s10 = sphi 0, %s14
      %p11 = scmp.ge.s32.totalorder %s10, 4
      %s20 = sphi 0, %s22
      %s23 = sphi 0, %s20
      %s24 = sphi 0, %s23
      %s40 = sphi 0, %s24
      %s46 = sphi 0, %s48
      %s49 = sphi 0, %s46
      %s50 = sphi 0, %s49
      %s66 = sphi 0, %s50
    $region4: #{tpu_custom_call.1} parent=1 // loop_header_branch
      %13 = sbr.rel (%p11) target = $region8
    $region5: #{tpu_custom_call.1} parent=1 // loop_body
      %s15 = ssub.s32 %s10, 1
      %s16 = ssub.s32 %s10, 2
      %s17 = sadd.s32 %s10, 1
      %s18 = ssub.s32 %s10, %s17
      %p19 = scmp.eq.s32.totalorder %s18, 0
      %s21 = sadd.s32 %s20, 1
      %s22 = scalar_select %p19, %s20, %s21
      %p25 = pneg %p19
      %p26 = scmp.eq.s32.totalorder %s10, 1
      %p27 = por %p25, %p26
      %p28 = scmp.ne.s32.totalorder %s20, %s23
      %p29 = scmp.eq.s32.totalorder %s10, 0
      %p30 = por %p28, %p29
      %p31 = scmp.ne.s32.totalorder %s20, %s23
      %p32 = scmp.eq.s32.totalorder %s15, 1
      %p33 = por %p31, %p32
      %p34 = scmp.ne.s32.totalorder %s23, %s24
      %p35 = scmp.eq.s32.totalorder %s15, 0
      %p36 = por %p34, %p35
      %p37 = scmp.ne.s32.totalorder %s23, %s24
      %p38 = scmp.eq.s32.totalorder %s16, 1
      %p39 = por %p37, %p38
      %p41 = scmp.ne.s32.totalorder %s24, %s40
      %p42 = scmp.eq.s32.totalorder %s16, 0
      %p43 = por %p41, %p42
      %s44 = ssub.s32 %s10, %s17
      %p45 = scmp.eq.s32.totalorder %s44, 0
      %s47 = sadd.s32 %s46, 1
      %s48 = scalar_select %p45, %s46, %s47
      %p51 = pneg %p45
      %p52 = scmp.eq.s32.totalorder %s10, 1
      %p53 = por %p51, %p52
      %p54 = scmp.ne.s32.totalorder %s46, %s49
      %p55 = scmp.eq.s32.totalorder %s10, 0
      %p56 = por %p54, %p55
      %p57 = scmp.ne.s32.totalorder %s46, %s49
      %p58 = scmp.eq.s32.totalorder %s15, 1
      %p59 = por %p57, %p58
      %p60 = scmp.ne.s32.totalorder %s49, %s50
      %p61 = scmp.eq.s32.totalorder %s15, 0
      %p62 = por %p60, %p61
      %p63 = scmp.ne.s32.totalorder %s49, %s50
      %p64 = scmp.eq.s32.totalorder %s16, 1
      %p65 = por %p63, %p64
      %p67 = scmp.ne.s32.totalorder %s50, %s66
      %p68 = scmp.eq.s32.totalorder %s16, 0
      %p69 = por %p67, %p68
      %p70 = scmp.le.s32.totalorder 1, %s10
      %p71 = scmp.lt.s32.totalorder %s10, 3
      %p72 = pnand %p70, %p71
      %p73 = pneg %p72
      // Predicated region
      $region9: #{tpu_custom_call.1} parent=5 // pred_check
        _
      $region10: #{tpu_custom_call.1} parent=5 // pred_check_branch
        %75 = sbr.rel (%p72) target = $region12
      $region11: #{tpu_custom_call.1} parent=5 // pred_region
        %s76 = ssub.s32 %s10, 1
      $region12: #{tpu_custom_call.1} parent=5 // pred_fallthru
        _
      %p77 = scmp.lt.s32.totalorder %s10, 2
      // Predicated region
      $region13: #{tpu_custom_call.1} parent=5 // pred_check
        %p78 = pneg %p77
      $region14: #{tpu_custom_call.1} parent=5 // pred_check_branch
        %80 = sbr.rel (%p78) target = $region16
      $region15: #{tpu_custom_call.1} parent=5 // pred_region
        // Predicated region
        $region17: #{tpu_custom_call.1} parent=15 // pred_check
          %p81 = pneg %p30
        $region18: #{tpu_custom_call.1} parent=15 // pred_check_branch
          %83 = sbr.rel (%p81) target = $region20
        $region19: #{tpu_custom_call.1} parent=15 // pred_region
          %s84 = sand.u32 %s20, 1
          %s85 = scalar_lea.sflag [#allocation3], %s84
          %s86 = sand.u32 %s20, 1
          %s87 = smul.addr %s86, 8
          %s88 = scalar_lea.vmem [#allocation2], %s87
          %s90 = ssub.s32 128, 128
          %91 = vsyncadd %s85, %s90
          %s92 = smul.addr %s10, 128
          %s93 = scalar_lea.hbm %s0, %s92
          %s95 = sshll.u32 %s88, 4
          %s96 = int_to_ptr.vmem [resolvable:$true] %s95
          %98 = dma.hbm_to_vmem [thread:$0]  %s93, 128, %s96, %s85
        $region20: #{tpu_custom_call.1} parent=15 // pred_fallthru
          _
      $region16: #{tpu_custom_call.1} parent=5 // pred_fallthru
        _
      %p99 = scmp.le.s32.totalorder 1, %s10
      %p100 = scmp.lt.s32.totalorder %s10, 3
      %p101 = pnand %p99, %p100
      %p102 = pneg %p101
      // Predicated region
      $region21: #{tpu_custom_call.1} parent=5 // pred_check
        _
      $region22: #{tpu_custom_call.1} parent=5 // pred_check_branch
        %104 = sbr.rel (%p101) target = $region24
      $region23: #{tpu_custom_call.1} parent=5 // pred_region
        %s105 = ssub.s32 %s10, 1
        %s106 = sand.u32 %s23, 1
        %s107 = scalar_lea.sflag [#allocation3], %s106
        %s108 = sand.u32 %s23, 1
        %s109 = smul.addr %s108, 8
        %s110 = scalar_lea.vmem [#allocation2], %s109
        // Predicated region
        $region25: #{tpu_custom_call.1} parent=23 // pred_check
          %p111 = pneg %p36
        $region26: #{tpu_custom_call.1} parent=23 // pred_check_branch
          %113 = sbr.rel (%p111) target = $region28
        $region27: #{tpu_custom_call.1} parent=23 // pred_region
          %114 = dma.done %s107, 128
        $region28: #{tpu_custom_call.1} parent=23 // pred_fallthru
          _
        %s115 = sand.u32 %s23, 1
        %s116 = scalar_lea.sflag [#allocation3], %s115
        %s117 = sand.u32 %s23, 1
        %s118 = smul.addr %s117, 8
        %s119 = scalar_lea.vmem [#allocation2], %s118
        %p120 = pneg %p36
        %p121 = pneg %p33
        %p122 = pneg %p62
        %p123 = pneg %p59
        %p124 = scmp.lt.s32.totalorder %s15, 1
        %s125 = scalar_select %p124, %s15, 1
        %s126 = smul.addr %s125, 4
        %s127 = smul.addr %s126, 8
        %s128 = scalar_lea.vmem %s1, %s127
        %p129 = scmp.lt.s32.totalorder %s15, 1
        %s130 = scalar_select %p129, %s15, 1
        %s131 = smul.addr %s130, 4
        %s132 = smul.addr %s131, 8
        %s133 = scalar_lea.vmem %s1, %s132
        %v134 = vld [vmem:[%s110] sm:$0xff]
        %135 = vxpose.xlu0.b32.start [1/16] %v134, 128
        %136 = vxpose.xlu0.b32.cont [2/16] 0.0, 128
        %137 = vxpose.xlu0.b32.cont [3/16] 0.0, 128
        %138 = vxpose.xlu0.b32.cont [4/16] 0.0, 128
        %139 = vxpose.xlu0.b32.cont [5/16] 0.0, 128
        %140 = vxpose.xlu0.b32.cont [6/16] 0.0, 128
        %141 = vxpose.xlu0.b32.cont [7/16] 0.0, 128
        %142 = vxpose.xlu0.b32.cont [8/16] 0.0, 128
        %143 = vxpose.xlu0.b32.cont [9/16] 0.0, 128
        %144 = vxpose.xlu0.b32.cont [10/16] 0.0, 128
        %145 = vxpose.xlu0.b32.cont [11/16] 0.0, 128
        %146 = vxpose.xlu0.b32.cont [12/16] 0.0, 128
        %147 = vxpose.xlu0.b32.cont [13/16] 0.0, 128
        %148 = vxpose.xlu0.b32.cont [14/16] 0.0, 128
        %149 = vxpose.xlu0.b32.cont [15/16] 0.0, 128
        %150 = vxpose.xlu0.b32.end [16/16] 0.0, 128
        %v151 = vpop.trf.xlu0
        %v152 = vpop.trf.xlu0
        %v153 = vpop.trf.xlu0
        %v154 = vpop.trf.xlu0
        %v155 = vpop.trf.xlu0
        %v156 = vpop.trf.xlu0
        %v157 = vpop.trf.xlu0
        %v158 = vpop.trf.xlu0
        %v159 = vpop.trf.xlu0
        %v160 = vpop.trf.xlu0
        %v161 = vpop.trf.xlu0
        %v162 = vpop.trf.xlu0
        %v163 = vpop.trf.xlu0
        %v164 = vpop.trf.xlu0
        %v165 = vpop.trf.xlu0
        %v166 = vpop.trf.xlu0
        %vm167 = vcmask 64512
        %168 = vst.msk [vmem:[%s133] sm:$0xff] %vm167, %v151
        %169 = vst.msk [vmem:[%s133 + $0x8] sm:$0xff] %vm167, %v152
        %170 = vst.msk [vmem:[%s133 + $0x10] sm:$0xff] %vm167, %v153
        %171 = vst.msk [vmem:[%s133 + $0x18] sm:$0xff] %vm167, %v154
        %p172 = scmp.lt.s32.totalorder %s15, 1
        %s173 = scalar_select %p172, %s15, 1
        %s174 = smul.addr %s173, 4
        %s175 = smul.addr %s174, 8
        %s176 = scalar_lea.vmem %s1, %s175
        // Predicated region
        $region29: #{tpu_custom_call.1} parent=23 // pred_check
          %p177 = pneg %p59
        $region30: #{tpu_custom_call.1} parent=23 // pred_check_branch
          %179 = sbr.rel (%p177) target = $region32
        $region31: #{tpu_custom_call.1} parent=23 // pred_region
          _
        $region32: #{tpu_custom_call.1} parent=23 // pred_fallthru
          _
      $region24: #{tpu_custom_call.1} parent=5 // pred_fallthru
        _
      %p180 = scmp.le.s32.totalorder 2, %s10
      // Predicated region
      $region33: #{tpu_custom_call.1} parent=5 // pred_check
        %p181 = pneg %p180
      $region34: #{tpu_custom_call.1} parent=5 // pred_check_branch
        %183 = sbr.rel (%p181) target = $region36
      $region35: #{tpu_custom_call.1} parent=5 // pred_region
        %s184 = ssub.s32 %s10, 2
        // Predicated region
        $region37: #{tpu_custom_call.1} parent=35 // pred_check
          %p185 = pneg %p65
        $region38: #{tpu_custom_call.1} parent=35 // pred_check_branch
          %187 = sbr.rel (%p185) target = $region40
        $region39: #{tpu_custom_call.1} parent=35 // pred_region
          %p188 = scmp.lt.s32.totalorder %s16, 1
          %s189 = scalar_select %p188, %s16, 1
          %s190 = smul.addr %s189, 4
          %s191 = smul.addr %s190, 8
          %s192 = scalar_lea.vmem %s1, %s191
        $region40: #{tpu_custom_call.1} parent=35 // pred_fallthru
          _
      $region36: #{tpu_custom_call.1} parent=5 // pred_fallthru
        _
    $region6: #{tpu_custom_call.1} parent=1 // loop_footer
      %s14 = sadd.s32 1, %s10
    $region7: #{tpu_custom_call.1} parent=1 // loop_footer_branch
      %9 = sbr.rel target = $region3
    $region8: #{tpu_custom_call.1} parent=1 // loop_exit
      _
    %193 = vsyncpa [#allocation3], 1
    %s194 = scalar_lea.sflag [#allocation3], 1
    %195 = vsyncpa %s194, 1

</llo_original>
